<compile_context>
chip_gen: v7x
topology: tpu7x:2x2x1
jax: 0.10.0
libtpu: 0.0.40
codegen_flags: <defaults>
</compile_context>

<pallas_src>
import functools

import jax
import jax.numpy as jnp
from jax import lax
from jax.experimental import pallas as pl
from jax.experimental.pallas import tpu as pltpu

LANES = 128
GROUP_ROWS = 8     # one (8,128) f32 vreg per operand per loop step
UNROLL = 8         # fori_loop unroll factor (64 rows per unrolled segment)


def _cdiv(a, b):
    return -(-a // b)


def _dice_partials_kernel(p_ref, t_ref, out_ref, *,
                          tile_rows, nb_total, nb_per_slice,
                          rows_in_last, has_phantom):
    """Accumulates per-slice partial sums of p*t, p*p, t*t.

    p_ref, t_ref : VMEM (tile_rows, 128) tiles (original dtype; cast in-kernel)
    out_ref      : VMEM (1, 3, 8, 128) f32 lane-dense accumulator; the same
                   block is revisited across the inner "arbitrary" grid axis.
    """
    c = pl.program_id(0)              # slice index        ("parallel" axis)
    i = pl.program_id(1)              # block within slice ("arbitrary" axis)
    block_idx = c * nb_per_slice + i

    @pl.when(i == 0)
    def _init():
        out_ref[...] = jnp.zeros_like(out_ref)

    n_groups = tile_rows // GROUP_ROWS
    unroll = min(UNROLL, n_groups)

    def accumulate(masked):
        # Stream the tile through three single-vreg accumulators: 2 vld +
        # ~6 VALU ops per 8x128 group, no full-tile temporaries, so compute
        # stays hidden under the HBM DMA on every generation.
        def body(g, accs):
            acc_pt, acc_pp, acc_tt = accs
            r = pl.multiple_of(g * GROUP_ROWS, GROUP_ROWS)
            p = p_ref[pl.ds(r, GROUP_ROWS), :].astype(jnp.float32)
            t = t_ref[pl.ds(r, GROUP_ROWS), :].astype(jnp.float32)
            if masked:
                row = lax.broadcasted_iota(jnp.int32, (GROUP_ROWS, LANES), 0)
                keep = (row + g * GROUP_ROWS) < rows_in_last
                p = jnp.where(keep, p, 0.0)
                t = jnp.where(keep, t, 0.0)
            return (acc_pt + p * t, acc_pp + p * p, acc_tt + t * t)

        zero = jnp.zeros((GROUP_ROWS, LANES), jnp.float32)
        acc_pt, acc_pp, acc_tt = lax.fori_loop(
            0, n_groups, body, (zero, zero, zero), unroll=unroll)
        out_ref[0, 0] += acc_pt
        out_ref[0, 1] += acc_pp
        out_ref[0, 2] += acc_tt

    is_valid = (block_idx < nb_total) if has_phantom else None
    has_tail = rows_in_last != tile_rows    # static Python bool

    if has_tail:
        is_last = block_idx == (nb_total - 1)
        steady = jnp.logical_not(is_last)
        tail = is_last
        if has_phantom:
            steady = jnp.logical_and(is_valid, steady)
            tail = jnp.logical_and(is_valid, tail)

        @pl.when(steady)
        def _steady():
            accumulate(masked=False)

        @pl.when(tail)
        def _tail():
            accumulate(masked=True)
    else:
        if has_phantom:
            @pl.when(is_valid)
            def _valid():
                accumulate(masked=False)
        else:
            accumulate(masked=False)


def _pick_max_tile_rows():
    """Generation-aware max block rows (f32 block bytes = rows * 512)."""
    try:
        kind = jax.devices()[0].device_kind.lower()
    except Exception:
        return 4096
    if "v5 lite" in kind or "v5lite" in kind or "v5e" in kind:
        return 4096        # 2 MiB f32 block; safe under v5e's 16 MiB default scoped VMEM
    return 8192            # v6e / v7x: 4 MiB blocks amortize per-step overhead better


def dice_loss(pred, target, smooth=1e-6, max_tile_rows=None):
    """Pallas implementation of DiceLoss.forward(pred, target)."""
    assert pred.shape == target.shape, "pred/target must have the same shape"

    # Flatten (layout-preserving, no copy); keep the original dtype so the DMA
    # moves narrow data — the f32 cast happens in-kernel.
    p_flat = pred.reshape(-1)
    t_flat = target.reshape(-1)
    n = p_flat.shape[0]

    # Lane-align so the flat vector views as (rows, 128) without moving data.
    # Zero padding does not change any of the three sums.
    rem = n % LANES
    if rem:
        pad = LANES - rem
        p_flat = jnp.pad(p_flat, (0, pad))
        t_flat = jnp.pad(t_flat, (0, pad))
    rows = p_flat.shape[0] // LANES
    p2d = p_flat.reshape(rows, LANES)   # free reshape
    t2d = t_flat.reshape(rows, LANES)

    # Degenerate tiny inputs: pad to at least 8 rows so blocks are sublane-aligned.
    if rows < GROUP_ROWS:
        p2d = jnp.pad(p2d, ((0, GROUP_ROWS - rows), (0, 0)))
        t2d = jnp.pad(t2d, ((0, GROUP_ROWS - rows), (0, 0)))
        rows = GROUP_ROWS

    if max_tile_rows is None:
        max_tile_rows = _pick_max_tile_rows()
    tile_rows = min(max_tile_rows, (rows // GROUP_ROWS) * GROUP_ROWS)
    nb_total = _cdiv(rows, tile_rows)
    rows_in_last = rows - (nb_total - 1) * tile_rows

    # Split into 2 independent slices whenever there is more than one block so
    # v7x's two TensorCores each stream ~half the data (harmless / sequential
    # on single-TC v5e/v6e).  Odd block counts get one phantom block that is
    # clamped in the index_map and skipped in-kernel.
    num_slices = 2 if nb_total >= 2 else 1
    nb_per_slice = _cdiv(nb_total, num_slices)
    has_phantom = num_slices * nb_per_slice != nb_total

    def in_index_map(c, i):
        b = c * nb_per_slice + i
        if has_phantom:
            b = jnp.minimum(b, nb_total - 1)   # keep the prefetch DMA in bounds
        return (b, 0)

    kernel = functools.partial(
        _dice_partials_kernel,
        tile_rows=tile_rows,
        nb_total=nb_total,
        nb_per_slice=nb_per_slice,
        rows_in_last=rows_in_last,
        has_phantom=has_phantom,
    )

    # Double-buffered inputs + small output; explicit limit (feedback) with
    # headroom, kept well below v7x's 64 MiB physical VMEM.
    in_buf_bytes = 2 * tile_rows * LANES * (p2d.dtype.itemsize + t2d.dtype.itemsize)
    vmem_limit = int(min(60 << 20, max(32 << 20, in_buf_bytes + (8 << 20))))

    out_bytes = num_slices * 3 * 8 * LANES * 4
    cost = pl.CostEstimate(
        flops=5 * n,
        transcendentals=0,
        bytes_accessed=int(pred.size * pred.dtype.itemsize
                           + target.size * target.dtype.itemsize
                           + out_bytes),
    )

    partials = pl.pallas_call(
        kernel,
        out_shape=jax.ShapeDtypeStruct((num_slices, 3, 8, LANES), jnp.float32),
        grid_spec=pltpu.PrefetchScalarGridSpec(
            num_scalar_prefetch=0,
            grid=(num_slices, nb_per_slice),
            in_specs=[
                pl.BlockSpec((tile_rows, LANES), in_index_map),
                pl.BlockSpec((tile_rows, LANES), in_index_map),
            ],
            out_specs=pl.BlockSpec((1, 3, 8, LANES), lambda c, i: (c, 0, 0, 0)),
        ),
        compiler_params=pltpu.CompilerParams(
            dimension_semantics=("parallel", "arbitrary"),
            vmem_limit_bytes=vmem_limit,
        ),
        cost_estimate=cost,
    )(p2d, t2d)

    # Tiny finalize in the wrapper: reduce the (num_slices, 3, 8, 128) partials.
    sums = jnp.sum(partials, axis=(0, 2, 3))   # [sum(p*t), sum(p*p), sum(t*t)]
    intersection = sums[0]
    denominator = sums[1] + sums[2]
    smooth = jnp.float32(smooth)
    return jnp.float32(1.0) - (2.0 * intersection + smooth) / (denominator + smooth)


def dice_loss_ref(pred, target, smooth=1e-6):
    """Pure-JAX reference mirroring the PyTorch module."""
    p = pred.reshape(-1).astype(jnp.float32)
    t = target.reshape(-1).astype(jnp.float32)
    intersection = jnp.sum(p * t)
    denominator = jnp.sum(p * p) + jnp.sum(t * t)
    return 1.0 - (2.0 * intersection + smooth) / (denominator + smooth)


if __name__ == "__main__":
    key = jax.random.PRNGKey(0)
    k1, k2, k3, k4, k5, k6 = jax.random.split(key, 6)

    # 1) Small NCHW segmentation-style pred/target (single-block, single-slice path).
    pred = jax.nn.sigmoid(jax.random.normal(k1, (2, 4, 16, 16), jnp.float32))
    target = (jax.random.uniform(k2, (2, 4, 16, 16)) > 0.5).astype(jnp.float32)
    loss = jax.block_until_ready(dice_loss(pred, target))
    ref = jax.block_until_ready(dice_loss_ref(pred, target))
    assert jnp.allclose(loss, ref, atol=1e-5, rtol=1e-4), (loss, ref)

    # 2) Larger bf16 input with device-default tiling (narrow-dtype streaming).
    pred2 = jax.nn.sigmoid(
        jax.random.normal(k3, (3, 4, 125, 256), jnp.float32)).astype(jnp.bfloat16)
    target2 = (jax.random.uniform(k4, (3, 4, 125, 256)) > 0.5).astype(jnp.float32)
    loss2 = jax.block_until_ready(dice_loss(pred2, target2))
    ref2 = jax.block_until_ready(dice_loss_ref(pred2, target2))
    assert jnp.allclose(loss2, ref2, atol=1e-5, rtol=1e-4), (loss2, ref2)

    # 2b) Same data, small forced tiles: exercises multi-block, tail masking,
    #     the 2-slice split with an ODD block count (phantom block skip).
    loss2b = jax.block_until_ready(dice_loss(pred2, target2, max_tile_rows=1024))
    assert jnp.allclose(loss2b, ref2, atol=1e-5, rtol=1e-4), (loss2b, ref2)
    # 2c) Even block count, multi-block + tail.
    loss2c = jax.block_until_ready(dice_loss(pred2, target2, max_tile_rows=512))
    assert jnp.allclose(loss2c, ref2, atol=1e-5, rtol=1e-4), (loss2c, ref2)

    # 3) Non-lane-aligned, tiny input (lane + sublane zero-padding path).
    pred3 = jax.nn.sigmoid(jax.random.normal(k5, (2, 3, 7, 5), jnp.float32))
    target3 = (jax.random.uniform(k6, (2, 3, 7, 5)) > 0.5).astype(jnp.float32)
    loss3 = jax.block_until_ready(dice_loss(pred3, target3))
    ref3 = jax.block_until_ready(dice_loss_ref(pred3, target3))
    assert jnp.allclose(loss3, ref3, atol=1e-5, rtol=1e-4), (loss3, ref3)

    print("KERNEL_OK")
</pallas_src>

<mosaic_0001>
module attributes {stable_mosaic.version = 11 : i64} {
  func.func @_dice_partials_kernel(%arg0: i32, %arg1: i32, %arg2: memref<16x128xf32, #tpu.memory_space<vmem>>, %arg3: memref<16x128xf32, #tpu.memory_space<vmem>>, %arg4: memref<1x3x8x128xf32, #tpu.memory_space<vmem>>) attributes {dimension_semantics = [#tpu.dimension_semantics<parallel>, #tpu.dimension_semantics<arbitrary>], iteration_bounds = array<i64: 1, 1>, scalar_prefetch = 0 : i64, scratch_operands = 0 : i64, tpu.core_type = #tpu.core_type<tc>, window_params = [{transform_indices = @transform_0, window_bounds = array<i64: 16, 128>}, {transform_indices = @transform_1, window_bounds = array<i64: 16, 128>}, {transform_indices = @transform_2, window_bounds = array<i64: 1, 3, 8, 128>}]} {
    %c0_i32 = arith.constant 0 : i32
    %0 = arith.cmpi eq, %arg1, %c0_i32 : i32
    %1 = arith.extui %0 : i1 to i32
    %c0_i32_0 = arith.constant 0 : i32
    %2 = arith.cmpi ne, %1, %c0_i32_0 : i32
    scf.if %2 {
      %cst_28 = arith.constant 0.000000e+00 : f32
      %46 = vector.broadcast %cst_28 : f32 to vector<1x3x8x128xf32>
      %c0_29 = arith.constant 0 : index
      %c0_30 = arith.constant 0 : index
      %c0_31 = arith.constant 0 : index
      %c0_32 = arith.constant 0 : index
      %47 = vector.load %arg4[%c0_29, %c0_30, %c0_31, %c0_32] : memref<1x3x8x128xf32, #tpu.memory_space<vmem>>, vector<1x3x8x128xf32>
      tpu.vector_store %arg4[%c0_29, %c0_30, %c0_31, %c0_32], %46 {strides = array<i32>} : memref<1x3x8x128xf32, #tpu.memory_space<vmem>>, vector<1x3x8x128xf32>,
    } else {
    }
    %cst = arith.constant 0.000000e+00 : f32
    %3 = vector.broadcast %cst : f32 to vector<8x128xf32>
    %c0_i32_1 = arith.constant 0 : i32
    %c8_i32 = arith.constant 8 : i32
    %4 = arith.muli %c0_i32_1, %c8_i32 : i32
    %5 = tpu.assume_multiple %4, 8 : i32
    %6 = arith.index_cast %5 : i32 to index
    %c0 = arith.constant 0 : index
    %7 = vector.load %arg2[%6, %c0] : memref<16x128xf32, #tpu.memory_space<vmem>>, vector<8x128xf32>
    %8 = arith.index_cast %5 : i32 to index
    %c0_2 = arith.constant 0 : index
    %9 = vector.load %arg3[%8, %c0_2] : memref<16x128xf32, #tpu.memory_space<vmem>>, vector<8x128xf32>
    %10 = arith.mulf %7, %9 : vector<8x128xf32>
    %11 = arith.addf %3, %10 : vector<8x128xf32>
    %12 = arith.mulf %7, %7 : vector<8x128xf32>
    %13 = arith.addf %3, %12 : vector<8x128xf32>
    %14 = arith.mulf %9, %9 : vector<8x128xf32>
    %15 = arith.addf %3, %14 : vector<8x128xf32>
    %c1_i32 = arith.constant 1 : i32
    %c8_i32_3 = arith.constant 8 : i32
    %16 = arith.muli %c1_i32, %c8_i32_3 : i32
    %17 = tpu.assume_multiple %16, 8 : i32
    %18 = arith.index_cast %17 : i32 to index
    %c0_4 = arith.constant 0 : index
    %19 = vector.load %arg2[%18, %c0_4] : memref<16x128xf32, #tpu.memory_space<vmem>>, vector<8x128xf32>
    %20 = arith.index_cast %17 : i32 to index
    %c0_5 = arith.constant 0 : index
    %21 = vector.load %arg3[%20, %c0_5] : memref<16x128xf32, #tpu.memory_space<vmem>>, vector<8x128xf32>
    %22 = arith.mulf %19, %21 : vector<8x128xf32>
    %23 = arith.addf %11, %22 : vector<8x128xf32>
    %24 = arith.mulf %19, %19 : vector<8x128xf32>
    %25 = arith.addf %13, %24 : vector<8x128xf32>
    %26 = arith.mulf %21, %21 : vector<8x128xf32>
    %27 = arith.addf %15, %26 : vector<8x128xf32>
    %c2_i32 = arith.constant 2 : i32
    %c0_6 = arith.constant 0 : index
    %c0_7 = arith.constant 0 : index
    %c0_8 = arith.constant 0 : index
    %c0_9 = arith.constant 0 : index
    %28 = vector.load %arg4[%c0_6, %c0_7, %c0_8, %c0_9] : memref<1x3x8x128xf32, #tpu.memory_space<vmem>>, vector<1x1x8x128xf32>
    %29 = vector.shape_cast %28 : vector<1x1x8x128xf32> to vector<8x128xf32>
    %30 = arith.addf %29, %23 : vector<8x128xf32>
    %c0_10 = arith.constant 0 : index
    %c0_11 = arith.constant 0 : index
    %c0_12 = arith.constant 0 : index
    %c0_13 = arith.constant 0 : index
    %31 = vector.load %arg4[%c0_10, %c0_11, %c0_12, %c0_13] : memref<1x3x8x128xf32, #tpu.memory_space<vmem>>, vector<1x1x8x128xf32>
    %32 = vector.shape_cast %31 : vector<1x1x8x128xf32> to vector<8x128xf32>
    %33 = vector.shape_cast %30 : vector<8x128xf32> to vector<1x1x8x128xf32>
    tpu.vector_store %arg4[%c0_10, %c0_11, %c0_12, %c0_13], %33 {strides = array<i32>} : memref<1x3x8x128xf32, #tpu.memory_space<vmem>>, vector<1x1x8x128xf32>,
    %c0_14 = arith.constant 0 : index
    %c1 = arith.constant 1 : index
    %c0_15 = arith.constant 0 : index
    %c0_16 = arith.constant 0 : index
    %34 = vector.load %arg4[%c0_14, %c1, %c0_15, %c0_16] : memref<1x3x8x128xf32, #tpu.memory_space<vmem>>, vector<1x1x8x128xf32>
    %35 = vector.shape_cast %34 : vector<1x1x8x128xf32> to vector<8x128xf32>
    %36 = arith.addf %35, %25 : vector<8x128xf32>
    %c0_17 = arith.constant 0 : index
    %c1_18 = arith.constant 1 : index
    %c0_19 = arith.constant 0 : index
    %c0_20 = arith.constant 0 : index
    %37 = vector.load %arg4[%c0_17, %c1_18, %c0_19, %c0_20] : memref<1x3x8x128xf32, #tpu.memory_space<vmem>>, vector<1x1x8x128xf32>
    %38 = vector.shape_cast %37 : vector<1x1x8x128xf32> to vector<8x128xf32>
    %39 = vector.shape_cast %36 : vector<8x128xf32> to vector<1x1x8x128xf32>
    tpu.vector_store %arg4[%c0_17, %c1_18, %c0_19, %c0_20], %39 {strides = array<i32>} : memref<1x3x8x128xf32, #tpu.memory_space<vmem>>, vector<1x1x8x128xf32>,
    %c0_21 = arith.constant 0 : index
    %c2 = arith.constant 2 : index
    %c0_22 = arith.constant 0 : index
    %c0_23 = arith.constant 0 : index
    %40 = vector.load %arg4[%c0_21, %c2, %c0_22, %c0_23] : memref<1x3x8x128xf32, #tpu.memory_space<vmem>>, vector<1x1x8x128xf32>
    %41 = vector.shape_cast %40 : vector<1x1x8x128xf32> to vector<8x128xf32>
    %42 = arith.addf %41, %27 : vector<8x128xf32>
    %c0_24 = arith.constant 0 : index
    %c2_25 = arith.constant 2 : index
    %c0_26 = arith.constant 0 : index
    %c0_27 = arith.constant 0 : index
    %43 = vector.load %arg4[%c0_24, %c2_25, %c0_26, %c0_27] : memref<1x3x8x128xf32, #tpu.memory_space<vmem>>, vector<1x1x8x128xf32>
    %44 = vector.shape_cast %43 : vector<1x1x8x128xf32> to vector<8x128xf32>
    %45 = vector.shape_cast %42 : vector<8x128xf32> to vector<1x1x8x128xf32>
    tpu.vector_store %arg4[%c0_24, %c2_25, %c0_26, %c0_27], %45 {strides = array<i32>} : memref<1x3x8x128xf32, #tpu.memory_space<vmem>>, vector<1x1x8x128xf32>,
    return
  }
  func.func @transform_0(%arg0: i32, %arg1: i32) -> (i32, i32) {
    %c1_i32 = arith.constant 1 : i32
    %0 = arith.muli %arg0, %c1_i32 : i32
    %1 = arith.addi %0, %arg1 : i32
    %c0_i32 = arith.constant 0 : i32
    %c0_i32_0 = arith.constant 0 : i32
    return %1, %c0_i32 : i32, i32
  }
  func.func @transform_1(%arg0: i32, %arg1: i32) -> (i32, i32) {
    %c1_i32 = arith.constant 1 : i32
    %0 = arith.muli %arg0, %c1_i32 : i32
    %1 = arith.addi %0, %arg1 : i32
    %c0_i32 = arith.constant 0 : i32
    %c0_i32_0 = arith.constant 0 : i32
    return %1, %c0_i32 : i32, i32
  }
  func.func @transform_2(%arg0: i32, %arg1: i32) -> (i32, i32, i32, i32) {
    %c0_i32 = arith.constant 0 : i32
    %c0_i32_0 = arith.constant 0 : i32
    %c0_i32_1 = arith.constant 0 : i32
    %c0_i32_2 = arith.constant 0 : i32
    return %arg0, %c0_i32, %c0_i32_0, %c0_i32_1 : i32, i32, i32, i32
  }
}

</mosaic_0001>

<llo_original>
// kernel: tpu_custom_call.1
$region0: #{tpu_custom_call.1}
  #allocation0 [shape = 'u32[]', space=smem, size = 0x4, offset = 0x4, fixed_abs, tag = 'smem constant byte address 0x4 - core index']
  #allocation1 [shape = 'u32[144,128]{1,0:T(1,128)}', space=vmem, size = 0x12000, scoped, tag = 'internal scratch']
  %s0 = inlined_call_operand.hbm [shape: f32[16,128], index: 0, kind: input, shape index: {}]
  %s1 = inlined_call_operand.hbm [shape: f32[16,128], index: 1, kind: input, shape index: {}]
  %s2 = inlined_call_operand.hbm [shape: f32[1,3,8,128], index: 2, kind: output, shape index: {}]
  %s3 = sld [smem:[#allocation0]]
  $region30: #{tpu_custom_call.1} parent=0
    _
  %s5 = ssub.s32 1, %s3
  %s6 = scalar_select 0, %s5, %s3
  $region1: #{tpu_custom_call.1} parent=0
    #allocation2 [shape = 'u8[8192]{0}', space=vmem, size = 0x2000, scoped, tag = 'input window, operand 0, single buffered']
    #allocation3 [shape = 's32[1]{0}', space=sflag, size = 0x4, scoped, tag = 'scoped memory for tpu_custom_call.1']
    #allocation4 [shape = 's32[1]{0}', space=sflag, size = 0x4, scoped, tag = 'scoped memory for tpu_custom_call.1']
    #allocation5 [shape = 'u8[8192]{0}', space=vmem, size = 0x2000, scoped, tag = 'input window, operand 1, single buffered']
    #allocation6 [shape = 's32[1]{0}', space=sflag, size = 0x4, scoped, tag = 'scoped memory for tpu_custom_call.1']
    #allocation7 [shape = 'u8[12288]{0}', space=vmem, size = 0x3000, scoped, tag = 'output window, operand 0, single buffered']
    %7 = vsyncpa [#allocation3], 0
    %8 = vsyncpa [#allocation6], 0
    %9 = vsyncpa [#allocation4], 0
    // Predicated region
    $region2: #{tpu_custom_call.1} parent=1 // pred_check
      _
    $region3: #{tpu_custom_call.1} parent=1 // pred_check_branch
      %11 = sbr.rel (0) target = $region5
    $region4: #{tpu_custom_call.1} parent=1 // pred_region
      %s12 = sadd.s32 0, 0
      %s13 = smul.u32 2, %s12
      %s15 = ssub.s32 256, 256
      %16 = vsyncadd [#allocation3], %s15
      %s17 = smul.addr %s13, 128
      %s18 = scalar_lea.hbm %s0, %s17
      %s19 = sshll.u32 [#allocation2], 4
      %s20 = int_to_ptr.vmem [resolvable:$true] %s19
      %25 = dma.hbm_to_vmem [thread:$0]  %s18, 256, %s20, [#allocation3], 128, 128, 8
    $region5: #{tpu_custom_call.1} parent=1 // pred_fallthru
      _
    // Predicated region
    $region6: #{tpu_custom_call.1} parent=1 // pred_check
      _
    $region7: #{tpu_custom_call.1} parent=1 // pred_check_branch
      %27 = sbr.rel (0) target = $region9
    $region8: #{tpu_custom_call.1} parent=1 // pred_region
      %s28 = sadd.s32 0, 0
      %s29 = smul.u32 2, %s28
      %s31 = ssub.s32 256, 256
      %32 = vsyncadd [#allocation6], %s31
      %s33 = smul.addr %s29, 128
      %s34 = scalar_lea.hbm %s1, %s33
      %s35 = sshll.u32 [#allocation5], 4
      %s36 = int_to_ptr.vmem [resolvable:$true] %s35
      %41 = dma.hbm_to_vmem [thread:$0]  %s34, 256, %s36, [#allocation6], 128, 128, 8
    $region9: #{tpu_custom_call.1} parent=1 // pred_fallthru
      _
    // Predicated region
    $region10: #{tpu_custom_call.1} parent=1 // pred_check
      _
    $region11: #{tpu_custom_call.1} parent=1 // pred_check_branch
      %43 = sbr.rel (0) target = $region13
    $region12: #{tpu_custom_call.1} parent=1 // pred_region
      %44 = dma.done [#allocation3], 256
    $region13: #{tpu_custom_call.1} parent=1 // pred_fallthru
      _
    // Predicated region
    $region14: #{tpu_custom_call.1} parent=1 // pred_check
      _
    $region15: #{tpu_custom_call.1} parent=1 // pred_check_branch
      %46 = sbr.rel (0) target = $region17
    $region16: #{tpu_custom_call.1} parent=1 // pred_region
      %47 = dma.done [#allocation6], 256
    $region17: #{tpu_custom_call.1} parent=1 // pred_fallthru
      _
    %s48 = sadd.s32 0, 0
    %s49 = smul.u32 2, %s48
    %s50 = sadd.s32 0, 0
    %s51 = smul.u32 2, %s50
    %p52 = scmp.eq.s32.totalorder 0, 0
    // Predicated region
    $region18: #{tpu_custom_call.1} parent=1 // pred_check
      %p53 = pneg %p52
    $region19: #{tpu_custom_call.1} parent=1 // pred_check_branch
      %55 = sbr.rel (%p53) target = $region21
    $region20: #{tpu_custom_call.1} parent=1 // pred_region
      %56 = vst [vmem:[#allocation7] sm:$0xff] 0.0
      %57 = vst [vmem:[#allocation7 + $0x8] sm:$0xff] 0.0
      %58 = vst [vmem:[#allocation7 + $0x10] sm:$0xff] 0.0
    $region21: #{tpu_custom_call.1} parent=1 // pred_fallthru
      _
    %v59 = vld [vmem:[#allocation2] sm:$0xff]
    %v60 = vld [vmem:[#allocation5] sm:$0xff]
    %v61 = vmul.f32 %v59, %v60
    %v62 = vadd.f32 %v61, 0.0
    %v63 = vmul.f32 %v59, %v59
    %v64 = vadd.f32 %v63, 0.0
    %v65 = vmul.f32 %v60, %v60
    %v66 = vadd.f32 %v65, 0.0
    %s67 = scalar_lea.vmem [#allocation2], 8
    %v68 = vld [vmem:[%s67] sm:$0xff]
    %s69 = scalar_lea.vmem [#allocation5], 8
    %v70 = vld [vmem:[%s69] sm:$0xff]
    %v71 = vmul.f32 %v68, %v70
    %v72 = vadd.f32 %v62, %v71
    %v73 = vmul.f32 %v68, %v68
    %v74 = vadd.f32 %v64, %v73
    %v75 = vmul.f32 %v70, %v70
    %v76 = vadd.f32 %v66, %v75
    %v77 = vld [vmem:[#allocation7] sm:$0xff]
    %v78 = vadd.f32 %v77, %v72
    %79 = vst [vmem:[#allocation7] sm:$0xff] %v78
    %s80 = scalar_lea.vmem [#allocation7], 8
    %v81 = vld [vmem:[%s80] sm:$0xff]
    %v82 = vadd.f32 %v81, %v74
    %83 = vst [vmem:[%s80] sm:$0xff] %v82
    %s84 = scalar_lea.vmem [#allocation7], 16
    %v85 = vld [vmem:[%s84] sm:$0xff]
    %v86 = vadd.f32 %v85, %v76
    %87 = vst [vmem:[%s84] sm:$0xff] %v86
    // Predicated region
    $region22: #{tpu_custom_call.1} parent=1 // pred_check
      _
    $region23: #{tpu_custom_call.1} parent=1 // pred_check_branch
      %89 = sbr.rel (0) target = $region25
    $region24: #{tpu_custom_call.1} parent=1 // pred_region
      %s91 = ssub.s32 384, 384
      %92 = vsyncadd [#allocation4], %s91
      %s93 = sshll.u32 [#allocation7], 4
      %s94 = int_to_ptr.vmem [resolvable:$true] %s93
      %99 = dma.vmem_to_hbm [thread:$0]  %s94, 384, %s2, [#allocation4], 128, 128, 8
    $region25: #{tpu_custom_call.1} parent=1 // pred_fallthru
      _
    // Predicated region
    $region26: #{tpu_custom_call.1} parent=1 // pred_check
      _
    $region27: #{tpu_custom_call.1} parent=1 // pred_check_branch
      %101 = sbr.rel (0) target = $region29
    $region28: #{tpu_custom_call.1} parent=1 // pred_region
      %102 = dma.done [#allocation4], 384
    $region29: #{tpu_custom_call.1} parent=1 // pred_fallthru
      _
    %103 = vsyncpa [#allocation3], 1
    %104 = vsyncpa [#allocation6], 1
    %105 = vsyncpa [#allocation4], 1

</llo_original>
